<compile_context>
chip_gen: v7x
topology: tpu7x:2x2x1
jax: 0.10.0
libtpu: 0.0.40
codegen_flags: <defaults>
</compile_context>

<pallas_src>
import functools

import jax
import jax.numpy as jnp
from jax.experimental import pallas as pl
from jax.experimental.pallas import tpu as pltpu


def _round_up(n: int, m: int) -> int:
    return ((n + m - 1) // m) * m


def _fused_mlp_kernel(x_ref, *refs, num_layers: int, true_input_size: int,
                      true_output_size: int, use_bf16_matmul: bool,
                      vpu_k_max: int = 8):
    """Fused MLP forward.

    refs = (w1, b1, w2, b2, ..., wL, bL, o_ref):
      x_ref : (B, input_size)   unpadded
      w_0   : (8, N0p)          (VPU path, only rows < true_input_size read)
              or (input_size, N0p) for the MXU path
      w_l>0 : (K_lp, N_lp)      zero-padded to 128 granules
      b_l   : (1, N_lp)         zero-padded
      o_ref : (B, true_output_size)  unpadded (written from a static slice)
    Padding is with zeros, so padded lanes stay exactly zero through every
    Linear + ReLU and the true result lives in the leading columns.
    """
    o_ref = refs[2 * num_layers]
    h = x_ref[...]                                 # (B, input_size) f32

    for l in range(num_layers):
        w_ref = refs[2 * l]
        b_ref = refs[2 * l + 1]

        if l == 0 and true_input_size <= vpu_k_max:
            # Tiny fan-in: VPU broadcast-multiply-add; skip the MXU round-trip.
            acc = h[:, 0:1] * w_ref[0:1, :]
            for k in range(1, true_input_size):
                acc = acc + h[:, k:k + 1] * w_ref[k:k + 1, :]
            y = acc + b_ref[...]
        else:
            if use_bf16_matmul:
                y = jnp.dot(h.astype(jnp.bfloat16),
                            w_ref[...].astype(jnp.bfloat16),
                            preferred_element_type=jnp.float32)
            else:
                y = jnp.dot(h, w_ref[...],
                            preferred_element_type=jnp.float32)
            y = y + b_ref[...]                     # bias/ReLU epilogue in f32

        if l < num_layers - 1:                     # hidden layers: ReLU (VPU)
            y = jnp.maximum(y, 0.0)
        h = y

    # Write the true (B, output_size) result; static slice, no wrapper-side HLO.
    o_ref[...] = h[:, :true_output_size]


def init_simple_nn(key, input_size, hidden_sizes, output_size):
    """Deterministic init matching nn.Linear default: U(-1/sqrt(in), 1/sqrt(in)).

    Weights are stored pre-transposed as (in, out) so the kernel computes
    y = x @ W_t + b, identical to PyTorch's y = x @ W.T + b.
    """
    sizes = [input_size] + list(hidden_sizes) + [output_size]
    params = []
    for i in range(len(sizes) - 1):
        fan_in, fan_out = sizes[i], sizes[i + 1]
        key, kw, kb = jax.random.split(key, 3)
        bound = 1.0 / jnp.sqrt(jnp.float32(fan_in))
        w_t = jax.random.uniform(kw, (fan_in, fan_out), jnp.float32, -bound, bound)
        b = jax.random.uniform(kb, (fan_out,), jnp.float32, -bound, bound)
        params.append((w_t, b))
    return params


def build_simple_nn_forward(params, input_size, output_size,
                            use_bf16_matmul=False, vpu_k_max=8):
    """Pads params once (build time) and returns a jitted fused forward fn."""
    num_layers = len(params)

    padded = []
    for l, (w_t, b) in enumerate(params):
        K, N = w_t.shape
        Np = _round_up(N, 128)
        if l == 0:
            # Layer 0: VPU path only reads rows < input_size -> sublane granule
            # padding (8) is enough; MXU path must match unpadded x (K as-is).
            Kp = _round_up(K, 8) if K <= vpu_k_max else K
        else:
            Kp = _round_up(K, 128)
        w_dtype = jnp.bfloat16 if (use_bf16_matmul and l > 0) else jnp.float32
        w_p = jnp.zeros((Kp, Np), w_dtype).at[:K, :N].set(w_t.astype(w_dtype))
        b_p = jnp.zeros((1, Np), jnp.float32).at[0, :N].set(b)
        padded.append((w_p, b_p))

    kern = functools.partial(
        _fused_mlp_kernel,
        num_layers=num_layers,
        true_input_size=input_size,
        true_output_size=output_size,
        use_bf16_matmul=use_bf16_matmul,
        vpu_k_max=vpu_k_max,
    )

    flat_params = []
    for w_p, b_p in padded:
        flat_params.extend((w_p, b_p))

    n_inputs = 1 + 2 * num_layers

    def forward(x):
        B = x.shape[0]
        # x goes in unpadded; output comes out unpadded. No wrapper-side HLOs.
        return pl.pallas_call(
            kern,
            out_shape=jax.ShapeDtypeStruct((B, output_size), jnp.float32),
            # Whole-array blocks resident in VMEM; single invocation, no grid.
            in_specs=[pl.BlockSpec(memory_space=pltpu.MemorySpace.VMEM)] * n_inputs,
            out_specs=pl.BlockSpec(memory_space=pltpu.MemorySpace.VMEM),
        )(x, *flat_params)

    return jax.jit(forward)


if __name__ == "__main__":
    # XOR-style configuration, small shapes (matches the PyTorch spec usage).
    input_size = 2
    hidden_sizes = [32, 16]
    output_size = 1
    batch = 4

    key = jax.random.PRNGKey(0)
    key, kx = jax.random.split(key)
    params = init_simple_nn(key, input_size, hidden_sizes, output_size)

    x = jax.random.uniform(kx, (batch, input_size), jnp.float32)

    forward = build_simple_nn_forward(params, input_size, output_size)
    out = forward(x)
    out = jax.block_until_ready(out)

    # Reference check in plain JAX (same math, unpadded).
    ref = x
    for w_t, b in params[:-1]:
        ref = jnp.maximum(ref @ w_t + b, 0.0)
    ref = ref @ params[-1][0] + params[-1][1]

    assert out.shape == (batch, output_size)
    assert jnp.allclose(out, ref, atol=1e-5, rtol=1e-5)

    print("KERNEL_OK")
</pallas_src>

<mosaic_0001>
module attributes {stable_mosaic.version = 11 : i64} {
  func.func @_fused_mlp_kernel(%arg0: memref<4x2xf32, #tpu.memory_space<vmem>>, %arg1: memref<8x128xf32, #tpu.memory_space<vmem>>, %arg2: memref<1x128xf32, #tpu.memory_space<vmem>>, %arg3: memref<128x128xf32, #tpu.memory_space<vmem>>, %arg4: memref<1x128xf32, #tpu.memory_space<vmem>>, %arg5: memref<128x128xf32, #tpu.memory_space<vmem>>, %arg6: memref<1x128xf32, #tpu.memory_space<vmem>>, %arg7: memref<4x1xf32, #tpu.memory_space<vmem>>) attributes {dimension_semantics = [], scalar_prefetch = 0 : i64, scratch_operands = 0 : i64, tpu.core_type = #tpu.core_type<tc>} {
    %c0 = arith.constant 0 : index
    %c0_0 = arith.constant 0 : index
    %0 = vector.load %arg0[%c0, %c0_0] : memref<4x2xf32, #tpu.memory_space<vmem>>, vector<4x2xf32>
    %1 = vector.extract_strided_slice %0 {offsets = [0, 0], sizes = [4, 1], strides = [1, 1]} : vector<4x2xf32> to vector<4x1xf32>
    %c0_1 = arith.constant 0 : index
    %c0_2 = arith.constant 0 : index
    %2 = vector.load %arg1[%c0_1, %c0_2] : memref<8x128xf32, #tpu.memory_space<vmem>>, vector<1x128xf32>
    %3 = vector.broadcast %1 : vector<4x1xf32> to vector<4x128xf32>
    %4 = vector.broadcast %2 : vector<1x128xf32> to vector<4x128xf32>
    %5 = arith.mulf %3, %4 : vector<4x128xf32>
    %6 = vector.extract_strided_slice %0 {offsets = [0, 1], sizes = [4, 1], strides = [1, 1]} : vector<4x2xf32> to vector<4x1xf32>
    %c1 = arith.constant 1 : index
    %c0_3 = arith.constant 0 : index
    %7 = vector.load %arg1[%c1, %c0_3] : memref<8x128xf32, #tpu.memory_space<vmem>>, vector<1x128xf32>
    %8 = vector.broadcast %6 : vector<4x1xf32> to vector<4x128xf32>
    %9 = vector.broadcast %7 : vector<1x128xf32> to vector<4x128xf32>
    %10 = arith.mulf %8, %9 : vector<4x128xf32>
    %11 = arith.addf %5, %10 : vector<4x128xf32>
    %c0_4 = arith.constant 0 : index
    %c0_5 = arith.constant 0 : index
    %12 = vector.load %arg2[%c0_4, %c0_5] : memref<1x128xf32, #tpu.memory_space<vmem>>, vector<1x128xf32>
    %13 = vector.broadcast %12 : vector<1x128xf32> to vector<4x128xf32>
    %14 = arith.addf %11, %13 : vector<4x128xf32>
    %cst = arith.constant 0.000000e+00 : f32
    %15 = vector.broadcast %cst : f32 to vector<4x128xf32>
    %16 = arith.maximumf %14, %15 : vector<4x128xf32>
    %c0_6 = arith.constant 0 : index
    %c0_7 = arith.constant 0 : index
    %17 = vector.load %arg3[%c0_6, %c0_7] : memref<128x128xf32, #tpu.memory_space<vmem>>, vector<128x128xf32>
    %cst_8 = arith.constant dense<0.000000e+00> : vector<4x128xf32>
    %18 = tpu.matmul %16, %17, %cst_8 {dimension_numbers = #tpu.dot_dimension_numbers<[1], [0], [0], [1], [0, 0, 1, 1], [], []>} : vector<4x128xf32>, vector<128x128xf32>, vector<4x128xf32> -> vector<4x128xf32>
    %c0_9 = arith.constant 0 : index
    %c0_10 = arith.constant 0 : index
    %19 = vector.load %arg4[%c0_9, %c0_10] : memref<1x128xf32, #tpu.memory_space<vmem>>, vector<1x128xf32>
    %20 = vector.broadcast %19 : vector<1x128xf32> to vector<4x128xf32>
    %21 = arith.addf %18, %20 : vector<4x128xf32>
    %cst_11 = arith.constant 0.000000e+00 : f32
    %22 = vector.broadcast %cst_11 : f32 to vector<4x128xf32>
    %23 = arith.maximumf %21, %22 : vector<4x128xf32>
    %c0_12 = arith.constant 0 : index
    %c0_13 = arith.constant 0 : index
    %24 = vector.load %arg5[%c0_12, %c0_13] : memref<128x128xf32, #tpu.memory_space<vmem>>, vector<128x128xf32>
    %cst_14 = arith.constant dense<0.000000e+00> : vector<4x128xf32>
    %25 = tpu.matmul %23, %24, %cst_14 {dimension_numbers = #tpu.dot_dimension_numbers<[1], [0], [0], [1], [0, 0, 1, 1], [], []>} : vector<4x128xf32>, vector<128x128xf32>, vector<4x128xf32> -> vector<4x128xf32>
    %c0_15 = arith.constant 0 : index
    %c0_16 = arith.constant 0 : index
    %26 = vector.load %arg6[%c0_15, %c0_16] : memref<1x128xf32, #tpu.memory_space<vmem>>, vector<1x128xf32>
    %27 = vector.broadcast %26 : vector<1x128xf32> to vector<4x128xf32>
    %28 = arith.addf %25, %27 : vector<4x128xf32>
    %29 = vector.extract_strided_slice %28 {offsets = [0, 0], sizes = [4, 1], strides = [1, 1]} : vector<4x128xf32> to vector<4x1xf32>
    %c0_17 = arith.constant 0 : index
    %c0_18 = arith.constant 0 : index
    %30 = vector.load %arg7[%c0_17, %c0_18] : memref<4x1xf32, #tpu.memory_space<vmem>>, vector<4x1xf32>
    tpu.vector_store %arg7[%c0_17, %c0_18], %29 {strides = array<i32>} : memref<4x1xf32, #tpu.memory_space<vmem>>, vector<4x1xf32>,
    return
  }
}

</mosaic_0001>

<llo_original>
// kernel: forward.1
$region0: #{forward.1}
  #allocation0 [shape = 'u32[]', space=smem, size = 0x4, offset = 0x4, fixed_abs, tag = 'smem constant byte address 0x4 - core index']
  #allocation1 [shape = 'u32[144,128]{1,0:T(1,128)}', space=vmem, size = 0x12000, scoped, tag = 'internal scratch']
  %s0 = inlined_call_operand.vmem [shape: f32[4,2], index: 0, kind: input, shape index: {}]
  %s1 = inlined_call_operand.vmem [shape: f32[8,128], index: 1, kind: input, shape index: {}]
  %s2 = inlined_call_operand.vmem [shape: f32[1,128], index: 2, kind: input, shape index: {}]
  %s3 = inlined_call_operand.hbm [shape: f32[128,128], index: 3, kind: input, shape index: {}]
  %s4 = inlined_call_operand.vmem [shape: f32[1,128], index: 4, kind: input, shape index: {}]
  %s5 = inlined_call_operand.hbm [shape: f32[128,128], index: 5, kind: input, shape index: {}]
  %s6 = inlined_call_operand.vmem [shape: f32[1,128], index: 6, kind: input, shape index: {}]
  %s7 = inlined_call_operand.vmem [shape: f32[4,1], index: 7, kind: output, shape index: {}]
  %s8 = sld [smem:[#allocation0]]
  $region46: #{forward.1} parent=0
    _
  %s10 = ssub.s32 1, %s8
  %s11 = scalar_select 0, %s10, %s8
  $region1: #{forward.1} parent=0
    #allocation2 [shape = 'u8[65536]{0}', space=vmem, size = 0x10000, scoped, tag = 'input window, operand 3, single buffered']
    #allocation3 [shape = 's32[1]{0}', space=sflag, size = 0x4, scoped, tag = 'scoped memory for forward.1']
    #allocation4 [shape = 'u8[65536]{0}', space=vmem, size = 0x10000, scoped, tag = 'input window, operand 5, single buffered']
    #allocation5 [shape = 's32[1]{0}', space=sflag, size = 0x4, scoped, tag = 'scoped memory for forward.1']
    %12 = vsyncpa [#allocation3], 0
    %13 = vsyncpa [#allocation5], 0
    // Predicated region
    $region2: #{forward.1} parent=1 // pred_check
      _
    $region3: #{forward.1} parent=1 // pred_check_branch
      %15 = sbr.rel (0) target = $region5
    $region4: #{forward.1} parent=1 // pred_region
      _
    $region5: #{forward.1} parent=1 // pred_fallthru
      _
    // Predicated region
    $region6: #{forward.1} parent=1 // pred_check
      _
    $region7: #{forward.1} parent=1 // pred_check_branch
      %17 = sbr.rel (0) target = $region9
    $region8: #{forward.1} parent=1 // pred_region
      _
    $region9: #{forward.1} parent=1 // pred_fallthru
      _
    // Predicated region
    $region10: #{forward.1} parent=1 // pred_check
      _
    $region11: #{forward.1} parent=1 // pred_check_branch
      %19 = sbr.rel (0) target = $region13
    $region12: #{forward.1} parent=1 // pred_region
      _
    $region13: #{forward.1} parent=1 // pred_fallthru
      _
    // Predicated region
    $region14: #{forward.1} parent=1 // pred_check
      _
    $region15: #{forward.1} parent=1 // pred_check_branch
      %21 = sbr.rel (0) target = $region17
    $region16: #{forward.1} parent=1 // pred_region
      %s23 = ssub.s32 2048, 2048
      %24 = vsyncadd [#allocation3], %s23
      %s25 = sshll.u32 [#allocation2], 4
      %s26 = int_to_ptr.vmem [resolvable:$true] %s25
      %31 = dma.hbm_to_vmem [thread:$0]  %s3, 2048, %s26, [#allocation3], 128, 128, 8
    $region17: #{forward.1} parent=1 // pred_fallthru
      _
    // Predicated region
    $region18: #{forward.1} parent=1 // pred_check
      _
    $region19: #{forward.1} parent=1 // pred_check_branch
      %33 = sbr.rel (0) target = $region21
    $region20: #{forward.1} parent=1 // pred_region
      _
    $region21: #{forward.1} parent=1 // pred_fallthru
      _
    // Predicated region
    $region22: #{forward.1} parent=1 // pred_check
      _
    $region23: #{forward.1} parent=1 // pred_check_branch
      %35 = sbr.rel (0) target = $region25
    $region24: #{forward.1} parent=1 // pred_region
      %s37 = ssub.s32 2048, 2048
      %38 = vsyncadd [#allocation5], %s37
      %s39 = sshll.u32 [#allocation4], 4
      %s40 = int_to_ptr.vmem [resolvable:$true] %s39
      %45 = dma.hbm_to_vmem [thread:$0]  %s5, 2048, %s40, [#allocation5], 128, 128, 8
    $region25: #{forward.1} parent=1 // pred_fallthru
      _
    // Predicated region
    $region26: #{forward.1} parent=1 // pred_check
      _
    $region27: #{forward.1} parent=1 // pred_check_branch
      %47 = sbr.rel (0) target = $region29
    $region28: #{forward.1} parent=1 // pred_region
      _
    $region29: #{forward.1} parent=1 // pred_fallthru
      _
    // Predicated region
    $region30: #{forward.1} parent=1 // pred_check
      _
    $region31: #{forward.1} parent=1 // pred_check_branch
      %49 = sbr.rel (0) target = $region33
    $region32: #{forward.1} parent=1 // pred_region
      %50 = dma.done [#allocation3], 2048
    $region33: #{forward.1} parent=1 // pred_fallthru
      _
    // Predicated region
    $region34: #{forward.1} parent=1 // pred_check
      _
    $region35: #{forward.1} parent=1 // pred_check_branch
      %52 = sbr.rel (0) target = $region37
    $region36: #{forward.1} parent=1 // pred_region
      %53 = dma.done [#allocation5], 2048
    $region37: #{forward.1} parent=1 // pred_fallthru
      _
    %v54 = vld [vmem:[%s0] sm:$0xf]
    %v55 = vld [vmem:[%s1] sm:$0x1]
    %57 = vset.pattern.permute.xlu0 0
    %58 = vperm.xlu0 %57, %v54
    %v59 = vpop.permute.xlu0 %58
    %v61 = vlaneseq
    %v62 = vshrl.u32 %v61, 7
    %v63 = vsub.s32 0, %v62
    %v64 = vrot.slane %v55, %v63
    %v65 = vmul.f32 %v59, %v64
    %v66 = vld [vmem:[%s1 + $0x1] sm:$0x1]
    %67 = vset.pattern.permute.xlu0 1
    %68 = vperm.xlu0 %67, %v54
    %v69 = vpop.permute.xlu0 %68
    %v71 = vlaneseq
    %v72 = vshrl.u32 %v71, 7
    %v73 = vsub.s32 0, %v72
    %v74 = vrot.slane %v66, %v73
    %v75 = vmul.f32 %v69, %v74
    %v76 = vadd.f32 %v65, %v75
    %v77 = vld [vmem:[%s2] sm:$0x1]
    %v79 = vlaneseq
    %v80 = vshrl.u32 %v79, 7
    %v81 = vsub.s32 0, %v80
    %v82 = vrot.slane %v77, %v81
    %v84 = vadd.f32 %v76, %v82
    %v85 = vmax.f32 %v84, 0.0
    %v86 = vld [vmem:[#allocation2] sm:$0xff]
    %v87 = vld [vmem:[#allocation2 + $0x8] sm:$0xff]
    %v88 = vld [vmem:[#allocation2 + $0x10] sm:$0xff]
    %v89 = vld [vmem:[#allocation2 + $0x18] sm:$0xff]
    %v90 = vld [vmem:[#allocation2 + $0x20] sm:$0xff]
    %v91 = vld [vmem:[#allocation2 + $0x28] sm:$0xff]
    %v92 = vld [vmem:[#allocation2 + $0x30] sm:$0xff]
    %v93 = vld [vmem:[#allocation2 + $0x38] sm:$0xff]
    %v94 = vld [vmem:[#allocation2 + $0x40] sm:$0xff]
    %v95 = vld [vmem:[#allocation2 + $0x48] sm:$0xff]
    %v96 = vld [vmem:[#allocation2 + $0x50] sm:$0xff]
    %v97 = vld [vmem:[#allocation2 + $0x58] sm:$0xff]
    %v98 = vld [vmem:[#allocation2 + $0x60] sm:$0xff]
    %v99 = vld [vmem:[#allocation2 + $0x68] sm:$0xff]
    %v100 = vld [vmem:[#allocation2 + $0x70] sm:$0xff]
    %v101 = vld [vmem:[#allocation2 + $0x78] sm:$0xff]
    %v102 = vld [vmem:[%s4] sm:$0x1]
    %v104 = vlaneseq
    %v105 = vshrl.u32 %v104, 7
    %v106 = vsub.s32 0, %v105
    %v107 = vrot.slane %v102, %v106
    %109 = vmatprep.subr.mxu0 0.0
    %110 = vmatpush1.msra.mxu0 %v86
    %111 = vmatprep.subr.mxu0 0.0
    %112 = vmatpush1.msra.mxu0 %v87
    %113 = vmatprep.subr.mxu0 0.0
    %114 = vmatpush1.msra.mxu0 %v88
    %115 = vmatprep.subr.mxu0 0.0
    %116 = vmatpush1.msra.mxu0 %v89
    %117 = vmatprep.subr.mxu0 0.0
    %118 = vmatpush1.msra.mxu0 %v90
    %119 = vmatprep.subr.mxu0 0.0
    %120 = vmatpush1.msra.mxu0 %v91
    %121 = vmatprep.subr.mxu0 0.0
    %122 = vmatpush1.msra.mxu0 %v92
    %123 = vmatprep.subr.mxu0 0.0
    %124 = vmatpush1.msra.mxu0 %v93
    %125 = vmatprep.subr.mxu0 0.0
    %126 = vmatpush1.msra.mxu0 %v94
    %127 = vmatprep.subr.mxu0 0.0
    %128 = vmatpush1.msra.mxu0 %v95
    %129 = vmatprep.subr.mxu0 0.0
    %130 = vmatpush1.msra.mxu0 %v96
    %131 = vmatprep.subr.mxu0 0.0
    %132 = vmatpush1.msra.mxu0 %v97
    %133 = vmatprep.subr.mxu0 0.0
    %134 = vmatpush1.msra.mxu0 %v98
    %135 = vmatprep.subr.mxu0 0.0
    %136 = vmatpush1.msra.mxu0 %v99
    %137 = vmatprep.subr.mxu0 0.0
    %138 = vmatpush1.msra.mxu0 %v100
    %139 = vmatprep.subr.mxu0 0.0
    %140 = vmatpush1.msra.mxu0 %v101
    %141 = vmatprep.subr.mxu0 0.0
    %142 = vmatpush1.msra.mxu0 0.0
    %143 = vmatprep.subr.mxu0 0.0
    %144 = vmatpush1.msra.mxu0 0.0
    %145 = vmatprep.subr.mxu0 0.0
    %146 = vmatpush1.msra.mxu0 0.0
    %147 = vmatprep.subr.mxu0 0.0
    %148 = vmatpush1.msra.mxu0 0.0
    %149 = vmatprep.subr.mxu0 0.0
    %150 = vmatpush1.msra.mxu0 0.0
    %151 = vmatprep.subr.mxu0 0.0
    %152 = vmatpush1.msra.mxu0 0.0
    %153 = vmatprep.subr.mxu0 0.0
    %154 = vmatpush1.msra.mxu0 0.0
    %155 = vmatprep.subr.mxu0 0.0
    %156 = vmatpush1.msra.mxu0 0.0
    %157 = vmatprep.subr.mxu0 0.0
    %158 = vmatpush1.msra.mxu0 0.0
    %159 = vmatprep.subr.mxu0 0.0
    %160 = vmatpush1.msra.mxu0 0.0
    %161 = vmatprep.subr.mxu0 0.0
    %162 = vmatpush1.msra.mxu0 0.0
    %163 = vmatprep.subr.mxu0 0.0
    %164 = vmatpush1.msra.mxu0 0.0
    %165 = vmatprep.subr.mxu0 0.0
    %166 = vmatpush1.msra.mxu0 0.0
    %167 = vmatprep.subr.mxu0 0.0
    %168 = vmatpush1.msra.mxu0 0.0
    %169 = vmatprep.subr.mxu0 0.0
    %170 = vmatpush1.msra.mxu0 0.0
    %171 = vmatprep.subr.mxu0 0.0
    %172 = vmatpush1.msra.mxu0 0.0
    %173 = vmatprep.mubr.f32.mxu0 0.0
    %174 = vmatmul.mubr.f32.gmra.mrb[0].mxu0 %v85
    %v175 = vpop.f32.mrb[0].mxu0
    %v176 = vadd.f32 %v107, %v175
    %v177 = vpop.f32.mrb[0].mxu0
    %178 = vdwg.mxu0
    %v179 = vmax.f32 %v176, 0.0
    %v180 = vld [vmem:[#allocation4] sm:$0xff]
    %v181 = vld [vmem:[#allocation4 + $0x8] sm:$0xff]
    %v182 = vld [vmem:[#allocation4 + $0x10] sm:$0xff]
    %v183 = vld [vmem:[#allocation4 + $0x18] sm:$0xff]
    %v184 = vld [vmem:[#allocation4 + $0x20] sm:$0xff]
    %v185 = vld [vmem:[#allocation4 + $0x28] sm:$0xff]
    %v186 = vld [vmem:[#allocation4 + $0x30] sm:$0xff]
    %v187 = vld [vmem:[#allocation4 + $0x38] sm:$0xff]
    %v188 = vld [vmem:[#allocation4 + $0x40] sm:$0xff]
    %v189 = vld [vmem:[#allocation4 + $0x48] sm:$0xff]
    %v190 = vld [vmem:[#allocation4 + $0x50] sm:$0xff]
    %v191 = vld [vmem:[#allocation4 + $0x58] sm:$0xff]
    %v192 = vld [vmem:[#allocation4 + $0x60] sm:$0xff]
    %v193 = vld [vmem:[#allocation4 + $0x68] sm:$0xff]
    %v194 = vld [vmem:[#allocation4 + $0x70] sm:$0xff]
    %v195 = vld [vmem:[#allocation4 + $0x78] sm:$0xff]
    %v196 = vld [vmem:[%s6] sm:$0x1]
    %v198 = vlaneseq
    %v199 = vshrl.u32 %v198, 7
    %v200 = vsub.s32 0, %v199
    %v201 = vrot.slane %v196, %v200
    %203 = vmatprep.subr.mxu0 0.0
    %204 = vmatpush1.msra.mxu0 %v180
    %205 = vmatprep.subr.mxu0 0.0
    %206 = vmatpush1.msra.mxu0 %v181
    %207 = vmatprep.subr.mxu0 0.0
    %208 = vmatpush1.msra.mxu0 %v182
    %209 = vmatprep.subr.mxu0 0.0
    %210 = vmatpush1.msra.mxu0 %v183
    %211 = vmatprep.subr.mxu0 0.0
    %212 = vmatpush1.msra.mxu0 %v184
    %213 = vmatprep.subr.mxu0 0.0
    %214 = vmatpush1.msra.mxu0 %v185
    %215 = vmatprep.subr.mxu0 0.0
    %216 = vmatpush1.msra.mxu0 %v186
    %217 = vmatprep.subr.mxu0 0.0
    %218 = vmatpush1.msra.mxu0 %v187
    %219 = vmatprep.subr.mxu0 0.0
    %220 = vmatpush1.msra.mxu0 %v188
    %221 = vmatprep.subr.mxu0 0.0
    %222 = vmatpush1.msra.mxu0 %v189
    %223 = vmatprep.subr.mxu0 0.0
    %224 = vmatpush1.msra.mxu0 %v190
    %225 = vmatprep.subr.mxu0 0.0
    %226 = vmatpush1.msra.mxu0 %v191
    %227 = vmatprep.subr.mxu0 0.0
    %228 = vmatpush1.msra.mxu0 %v192
    %229 = vmatprep.subr.mxu0 0.0
    %230 = vmatpush1.msra.mxu0 %v193
    %231 = vmatprep.subr.mxu0 0.0
    %232 = vmatpush1.msra.mxu0 %v194
    %233 = vmatprep.subr.mxu0 0.0
    %234 = vmatpush1.msra.mxu0 %v195
    %235 = vmatprep.subr.mxu0 0.0
    %236 = vmatpush1.msra.mxu0 0.0
    %237 = vmatprep.subr.mxu0 0.0
    %238 = vmatpush1.msra.mxu0 0.0
    %239 = vmatprep.subr.mxu0 0.0
    %240 = vmatpush1.msra.mxu0 0.0
    %241 = vmatprep.subr.mxu0 0.0
    %242 = vmatpush1.msra.mxu0 0.0
    %243 = vmatprep.subr.mxu0 0.0
    %244 = vmatpush1.msra.mxu0 0.0
    %245 = vmatprep.subr.mxu0 0.0
    %246 = vmatpush1.msra.mxu0 0.0
    %247 = vmatprep.subr.mxu0 0.0
    %248 = vmatpush1.msra.mxu0 0.0
    %249 = vmatprep.subr.mxu0 0.0
    %250 = vmatpush1.msra.mxu0 0.0
    %251 = vmatprep.subr.mxu0 0.0
    %252 = vmatpush1.msra.mxu0 0.0
    %253 = vmatprep.subr.mxu0 0.0
    %254 = vmatpush1.msra.mxu0 0.0
    %255 = vmatprep.subr.mxu0 0.0
    %256 = vmatpush1.msra.mxu0 0.0
    %257 = vmatprep.subr.mxu0 0.0
    %258 = vmatpush1.msra.mxu0 0.0
    %259 = vmatprep.subr.mxu0 0.0
    %260 = vmatpush1.msra.mxu0 0.0
    %261 = vmatprep.subr.mxu0 0.0
    %262 = vmatpush1.msra.mxu0 0.0
    %263 = vmatprep.subr.mxu0 0.0
    %264 = vmatpush1.msra.mxu0 0.0
    %265 = vmatprep.subr.mxu0 0.0
    %266 = vmatpush1.msra.mxu0 0.0
    %267 = vmatprep.mubr.f32.mxu0 0.0
    %268 = vmatmul.mubr.f32.gmra.mrb[0].mxu0 %v179
    %v269 = vpop.f32.mrb[0].mxu0
    %v270 = vadd.f32 %v201, %v269
    %v271 = vpop.f32.mrb[0].mxu0
    %272 = vdwg.mxu0
    %vm273 = vcmask 3072
    %274 = vst.msk [vmem:[%s7] sm:$0xf] %vm273, %v270
    // Predicated region
    $region38: #{forward.1} parent=1 // pred_check
      _
    $region39: #{forward.1} parent=1 // pred_check_branch
      %276 = sbr.rel (0) target = $region41
    $region40: #{forward.1} parent=1 // pred_region
      _
    $region41: #{forward.1} parent=1 // pred_fallthru
      _
    // Predicated region
    $region42: #{forward.1} parent=1 // pred_check
      _
    $region43: #{forward.1} parent=1 // pred_check_branch
      %278 = sbr.rel (0) target = $region45
    $region44: #{forward.1} parent=1 // pred_region
      _
    $region45: #{forward.1} parent=1 // pred_fallthru
      _
    %279 = vsyncpa [#allocation3], 1
    %280 = vsyncpa [#allocation5], 1

</llo_original>
